<compile_context>
chip_gen: v5e
topology: v5e:2x2
jax: 0.10.0
libtpu: 0.0.40
codegen_flags: <defaults>
</compile_context>

<pallas_src>
import functools

import jax
import jax.numpy as jnp
from jax.experimental import pallas as pl
from jax.experimental.pallas import tpu as pltpu


def _round_up(n, m):
    return ((n + m - 1) // m) * m


def rate_model_kernel(x_ref, wf1_ref, bias1_ref, wf2_ref, bias2_ref, out_ref,
                      *, hp, cp):
    """One batch tile of the fused RateModel forward.

    wf1   = [W1^T | R1^T]        (D,  2*hp)   (bf16 or f32)
    bias1 = [v1   | h1 @ R1^T]   (1,  2*hp)   (f32)
    wf2   = [W2^T | R2^T]        (hp, 2*cp)
    bias2 = [v2   | h2 @ R2^T]   (1,  2*cp)
    """
    x = x_ref[...]                                      # (tile_b, D) f32

    # --- layer 1: single fused MXU dot over [W1 | R1], f32 accumulate ---
    y1 = jnp.dot(x.astype(wf1_ref.dtype), wf1_ref[...],
                 preferred_element_type=jnp.float32) + bias1_ref[...]
    a1 = y1[:, :hp]                                     # v1 + x @ W1^T
    b1 = y1[:, hp:]                                     # (x + h1) @ R1^T
    z1 = jnp.maximum(a1 + b1 * b1, 0.0)                 # f32 elementwise (VPU)

    # --- layer 2: same fused pattern ---
    y2 = jnp.dot(z1.astype(wf2_ref.dtype), wf2_ref[...],
                 preferred_element_type=jnp.float32) + bias2_ref[...]
    a2 = y2[:, :cp]
    b2 = y2[:, cp:]
    out_ref[...] = (a2 + b2 * b2).astype(out_ref.dtype)


def pack_params(p, weight_dtype=jnp.bfloat16):
    """Fuse + pad the raw parameters for the kernel.

    Padded rows/columns are zero-filled, so they contribute exact zeros and the
    wrapper can simply slice them off.
    """
    D, H = p["w1t"].shape
    _, C = p["w2t"].shape
    Hp = _round_up(H, 128)
    Cp = _round_up(C, 128)

    # Fold h into the squared branch:  (x + h) @ R = x @ R + (h @ R)
    c1 = p["h1"] @ p["r1t"]                 # (1, H)
    c2 = p["h2"] @ p["r2t"]                 # (1, C)

    wf1 = jnp.zeros((D, 2 * Hp), jnp.float32)
    wf1 = wf1.at[:, :H].set(p["w1t"]).at[:, Hp:Hp + H].set(p["r1t"])
    wf2 = jnp.zeros((Hp, 2 * Cp), jnp.float32)
    wf2 = wf2.at[:H, :C].set(p["w2t"]).at[:H, Cp:Cp + C].set(p["r2t"])

    bias1 = jnp.zeros((1, 2 * Hp), jnp.float32)
    bias1 = bias1.at[:, :H].set(p["v1"]).at[:, Hp:Hp + H].set(c1)
    bias2 = jnp.zeros((1, 2 * Cp), jnp.float32)
    bias2 = bias2.at[:, :C].set(p["v2"]).at[:, Cp:Cp + C].set(c2)

    return {
        "wf1": wf1.astype(weight_dtype), "wf2": wf2.astype(weight_dtype),
        "bias1": bias1, "bias2": bias2,          # biases stay f32 (VPU math)
        "Hp": Hp, "Cp": Cp, "C": C, "D": D,
    }


def rate_model_forward(x, packed, *, tile_b=128):
    """x: (B, D) float32. packed: output of pack_params."""
    B, D = x.shape
    Hp, Cp, C = packed["Hp"], packed["Cp"], packed["C"]
    assert packed["D"] == D

    # Batch tile: multiple of 8 (f32 sublanes); 128+ fills the MXU M dim.
    tile_b = min(tile_b, _round_up(B, 8))
    Bp = _round_up(B, tile_b)
    xp = jnp.pad(x, ((0, Bp - B), (0, 0))) if Bp != B else x
    grid = (pl.cdiv(Bp, tile_b),)

    kernel = functools.partial(rate_model_kernel, hp=Hp, cp=Cp)
    weight_bytes = (packed["wf1"].nbytes + packed["wf2"].nbytes +
                    packed["bias1"].nbytes + packed["bias2"].nbytes)
    flops = 2 * Bp * (D * 2 * Hp + Hp * 2 * Cp)

    out = pl.pallas_call(
        kernel,
        out_shape=jax.ShapeDtypeStruct((Bp, Cp), jnp.float32),
        grid=grid,
        in_specs=[
            pl.BlockSpec((tile_b, D), lambda i: (i, 0)),      # x: streamed
            pl.BlockSpec((D, 2 * Hp), lambda i: (0, 0)),      # weights resident
            pl.BlockSpec((1, 2 * Hp), lambda i: (0, 0)),
            pl.BlockSpec((Hp, 2 * Cp), lambda i: (0, 0)),
            pl.BlockSpec((1, 2 * Cp), lambda i: (0, 0)),
        ],
        out_specs=pl.BlockSpec((tile_b, Cp), lambda i: (i, 0)),
        compiler_params=pltpu.CompilerParams(
            dimension_semantics=("parallel",),        # dual-TC / megacore
            vmem_limit_bytes=32 * 1024 * 1024,        # safe on v5e/v6e/v7x; far above need
        ),
        cost_estimate=pl.CostEstimate(
            flops=flops,
            transcendentals=0,
            bytes_accessed=xp.nbytes + Bp * Cp * 4 + weight_bytes,
        ),
    )(xp, packed["wf1"], packed["bias1"], packed["wf2"], packed["bias2"])

    return out[:B, :C]


def init_params(key, input_space, height, num_classes):
    """Deterministic parameter init (same shapes as the PyTorch module).

    NOTE: the PyTorch __init__ zero-fills R1/R2/h/v; here we use small nonzero
    deterministic values so the squared recurrent branch is actually exercised.
    """
    k = jax.random.split(key, 8)
    s_in = 1.0 / jnp.sqrt(jnp.float32(input_space))
    s_h = 1.0 / jnp.sqrt(jnp.float32(height))
    return {
        # stored transposed: (in, out)
        "w1t": jax.random.uniform(k[0], (input_space, height),
                                  jnp.float32, -s_in, s_in),
        "r1t": 0.1 * jax.random.normal(k[1], (input_space, height), jnp.float32),
        "h1":  0.1 * jax.random.normal(k[2], (1, input_space), jnp.float32),
        "v1":  0.1 * jax.random.normal(k[3], (1, height), jnp.float32),
        "w2t": jax.random.uniform(k[4], (height, num_classes),
                                  jnp.float32, -s_h, s_h),
        "r2t": 0.1 * jax.random.normal(k[5], (height, num_classes), jnp.float32),
        "h2":  0.1 * jax.random.normal(k[6], (1, height), jnp.float32),
        "v2":  0.1 * jax.random.normal(k[7], (1, num_classes), jnp.float32),
    }


def rate_model_ref(x, p):
    """Pure-JAX reference matching the PyTorch forward exactly (f32 weights)."""
    z1 = jax.nn.relu(p["v1"] + x @ p["w1t"] + ((x + p["h1"]) @ p["r1t"]) ** 2)
    return p["v2"] + z1 @ p["w2t"] + ((z1 + p["h2"]) @ p["r2t"]) ** 2


def rate_model_ref_packed(x, packed):
    """Reference that mirrors the kernel math with the same quantized operands."""
    Hp, Cp, C = packed["Hp"], packed["Cp"], packed["C"]
    wf1 = packed["wf1"].astype(jnp.float32)
    wf2 = packed["wf2"].astype(jnp.float32)
    xq = x.astype(packed["wf1"].dtype).astype(jnp.float32)
    y1 = xq @ wf1 + packed["bias1"]
    z1 = jnp.maximum(y1[:, :Hp] + y1[:, Hp:] ** 2, 0.0)
    z1q = z1.astype(packed["wf2"].dtype).astype(jnp.float32)
    y2 = z1q @ wf2 + packed["bias2"]
    return (y2[:, :Cp] + y2[:, Cp:] ** 2)[:, :C]


if __name__ == "__main__":
    key = jax.random.PRNGKey(0)
    kx, kp = jax.random.split(key)

    # Small shapes consistent with the module; batch is non-multiple of the
    # tile to exercise the padding + 2-step grid path.
    batch, input_space, height, num_classes = 200, 32, 32, 16
    x = jax.random.normal(kx, (batch, input_space), jnp.float32)
    params = init_params(kp, input_space, height, num_classes)
    packed = pack_params(params, weight_dtype=jnp.bfloat16)

    out = rate_model_forward(x, packed, tile_b=128)
    out = jax.block_until_ready(out)
    assert out.shape == (batch, num_classes)

    # Tight check vs a reference using the exact same bf16-quantized operands.
    ref_q = rate_model_ref_packed(x, packed)
    assert jnp.allclose(out, ref_q, atol=1e-3, rtol=1e-3), "mismatch vs packed ref"

    # Loose semantic check vs the original f32 module math (bf16 weight error).
    ref = rate_model_ref(x, params)
    assert jnp.allclose(out, ref, atol=5e-2, rtol=5e-2), "mismatch vs f32 ref"

    print("KERNEL_OK")
</pallas_src>

<mosaic_0001>
module attributes {stable_mosaic.version = 11 : i64} {
  func.func @rate_model_kernel(%arg0: i32, %arg1: memref<128x32xf32, #tpu.memory_space<vmem>>, %arg2: memref<32x256xbf16, #tpu.memory_space<vmem>>, %arg3: memref<1x256xf32, #tpu.memory_space<vmem>>, %arg4: memref<128x256xbf16, #tpu.memory_space<vmem>>, %arg5: memref<1x256xf32, #tpu.memory_space<vmem>>, %arg6: memref<128x128xf32, #tpu.memory_space<vmem>>) attributes {dimension_semantics = [#tpu.dimension_semantics<parallel>], iteration_bounds = array<i64: 2>, scalar_prefetch = 0 : i64, scratch_operands = 0 : i64, tpu.core_type = #tpu.core_type<tc>, window_params = [{transform_indices = @transform_0, window_bounds = array<i64: 128, 32>}, {pipeline_mode = #tpu.pipeline_mode<synchronous>, transform_indices = @transform_1, window_bounds = array<i64: 32, 256>}, {pipeline_mode = #tpu.pipeline_mode<synchronous>, transform_indices = @transform_2, window_bounds = array<i64: 1, 256>}, {pipeline_mode = #tpu.pipeline_mode<synchronous>, transform_indices = @transform_3, window_bounds = array<i64: 128, 256>}, {pipeline_mode = #tpu.pipeline_mode<synchronous>, transform_indices = @transform_4, window_bounds = array<i64: 1, 256>}, {transform_indices = @transform_5, window_bounds = array<i64: 128, 128>}]} {
    %c0 = arith.constant 0 : index
    %c0_0 = arith.constant 0 : index
    %0 = vector.load %arg1[%c0, %c0_0] : memref<128x32xf32, #tpu.memory_space<vmem>>, vector<128x32xf32>
    %1 = arith.truncf %0 : vector<128x32xf32> to vector<128x32xbf16>
    %c0_1 = arith.constant 0 : index
    %c0_2 = arith.constant 0 : index
    %2 = vector.load %arg2[%c0_1, %c0_2] : memref<32x256xbf16, #tpu.memory_space<vmem>>, vector<32x256xbf16>
    %cst = arith.constant dense<0.000000e+00> : vector<128x256xf32>
    %3 = tpu.matmul %1, %2, %cst {dimension_numbers = #tpu.dot_dimension_numbers<[1], [0], [0], [1], [0, 0, 1, 1], [], []>} : vector<128x32xbf16>, vector<32x256xbf16>, vector<128x256xf32> -> vector<128x256xf32>
    %c0_3 = arith.constant 0 : index
    %c0_4 = arith.constant 0 : index
    %4 = vector.load %arg3[%c0_3, %c0_4] : memref<1x256xf32, #tpu.memory_space<vmem>>, vector<1x256xf32>
    %5 = vector.broadcast %4 : vector<1x256xf32> to vector<128x256xf32>
    %6 = arith.addf %3, %5 : vector<128x256xf32>
    %7 = vector.extract_strided_slice %6 {offsets = [0, 0], sizes = [128, 128], strides = [1, 1]} : vector<128x256xf32> to vector<128x128xf32>
    %8 = vector.extract_strided_slice %6 {offsets = [0, 128], sizes = [128, 128], strides = [1, 1]} : vector<128x256xf32> to vector<128x128xf32>
    %9 = arith.mulf %8, %8 : vector<128x128xf32>
    %10 = arith.addf %7, %9 : vector<128x128xf32>
    %cst_5 = arith.constant 0.000000e+00 : f32
    %11 = vector.broadcast %cst_5 : f32 to vector<128x128xf32>
    %12 = arith.maximumf %10, %11 : vector<128x128xf32>
    %13 = arith.truncf %12 : vector<128x128xf32> to vector<128x128xbf16>
    %c0_6 = arith.constant 0 : index
    %c0_7 = arith.constant 0 : index
    %14 = vector.load %arg4[%c0_6, %c0_7] : memref<128x256xbf16, #tpu.memory_space<vmem>>, vector<128x256xbf16>
    %cst_8 = arith.constant dense<0.000000e+00> : vector<128x256xf32>
    %15 = tpu.matmul %13, %14, %cst_8 {dimension_numbers = #tpu.dot_dimension_numbers<[1], [0], [0], [1], [0, 0, 1, 1], [], []>} : vector<128x128xbf16>, vector<128x256xbf16>, vector<128x256xf32> -> vector<128x256xf32>
    %c0_9 = arith.constant 0 : index
    %c0_10 = arith.constant 0 : index
    %16 = vector.load %arg5[%c0_9, %c0_10] : memref<1x256xf32, #tpu.memory_space<vmem>>, vector<1x256xf32>
    %17 = vector.broadcast %16 : vector<1x256xf32> to vector<128x256xf32>
    %18 = arith.addf %15, %17 : vector<128x256xf32>
    %19 = vector.extract_strided_slice %18 {offsets = [0, 0], sizes = [128, 128], strides = [1, 1]} : vector<128x256xf32> to vector<128x128xf32>
    %20 = vector.extract_strided_slice %18 {offsets = [0, 128], sizes = [128, 128], strides = [1, 1]} : vector<128x256xf32> to vector<128x128xf32>
    %21 = arith.mulf %20, %20 : vector<128x128xf32>
    %22 = arith.addf %19, %21 : vector<128x128xf32>
    %c0_11 = arith.constant 0 : index
    %c0_12 = arith.constant 0 : index
    %23 = vector.load %arg6[%c0_11, %c0_12] : memref<128x128xf32, #tpu.memory_space<vmem>>, vector<128x128xf32>
    tpu.vector_store %arg6[%c0_11, %c0_12], %22 {strides = array<i32>} : memref<128x128xf32, #tpu.memory_space<vmem>>, vector<128x128xf32>,
    return
  }
  func.func @transform_0(%arg0: i32) -> (i32, i32) {
    %c0_i32 = arith.constant 0 : i32
    %c0_i32_0 = arith.constant 0 : i32
    return %arg0, %c0_i32 : i32, i32
  }
  func.func @transform_1(%arg0: i32) -> (i32, i32) {
    %c0_i32 = arith.constant 0 : i32
    %c0_i32_0 = arith.constant 0 : i32
    %c0_i32_1 = arith.constant 0 : i32
    return %c0_i32, %c0_i32_0 : i32, i32
  }
  func.func @transform_2(%arg0: i32) -> (i32, i32) {
    %c0_i32 = arith.constant 0 : i32
    %c0_i32_0 = arith.constant 0 : i32
    %c0_i32_1 = arith.constant 0 : i32
    return %c0_i32, %c0_i32_0 : i32, i32
  }
  func.func @transform_3(%arg0: i32) -> (i32, i32) {
    %c0_i32 = arith.constant 0 : i32
    %c0_i32_0 = arith.constant 0 : i32
    %c0_i32_1 = arith.constant 0 : i32
    return %c0_i32, %c0_i32_0 : i32, i32
  }
  func.func @transform_4(%arg0: i32) -> (i32, i32) {
    %c0_i32 = arith.constant 0 : i32
    %c0_i32_0 = arith.constant 0 : i32
    %c0_i32_1 = arith.constant 0 : i32
    return %c0_i32, %c0_i32_0 : i32, i32
  }
  func.func @transform_5(%arg0: i32) -> (i32, i32) {
    %c0_i32 = arith.constant 0 : i32
    %c0_i32_0 = arith.constant 0 : i32
    return %arg0, %c0_i32 : i32, i32
  }
}

</mosaic_0001>

<llo_original>
// kernel: tpu_custom_call.1
$region0: #{tpu_custom_call.1}
  #allocation0 [shape = 'u32[]', space=smem, size = 0x4, offset = 0x4, fixed_abs, tag = 'smem constant byte address 0x4 - core index']
  #allocation1 [shape = 'u32[72,128]{1,0:T(1,128)}', space=vmem, size = 0x9000, scoped, tag = 'internal scratch']
  %s0 = inlined_call_operand.vmem [shape: f32[256,32], index: 0, kind: input, shape index: {}]
  %s1 = inlined_call_operand.vmem [shape: bf16[32,256], index: 1, kind: input, shape index: {}]
  %s2 = inlined_call_operand.vmem [shape: f32[1,256], index: 2, kind: input, shape index: {}]
  %s3 = inlined_call_operand.vmem [shape: bf16[128,256], index: 3, kind: input, shape index: {}]
  %s4 = inlined_call_operand.vmem [shape: f32[1,256], index: 4, kind: input, shape index: {}]
  %s5 = inlined_call_operand.hbm [shape: f32[256,128], index: 5, kind: output, shape index: {}]
  %s6 = sld [smem:[#allocation0]]
  $region53: #{tpu_custom_call.1} parent=0
    _
  %s8 = ssub.s32 1, %s6
  %s9 = scalar_select 0, %s8, %s6
  $region1: #{tpu_custom_call.1} parent=0
    #allocation2 [shape = 'u8[131072]{0}', space=vmem, size = 0x20000, scoped, tag = 'output window, operand 0']
    #allocation3 [shape = 's32[2]{0}', space=sflag, size = 0x8, scoped, tag = 'scoped memory for tpu_custom_call.1']
    %10 = vsyncpa [#allocation3], 0
    %s11 = scalar_lea.sflag [#allocation3], 1
    %12 = vsyncpa %s11, 0
    loop: start=0, step=1, limit=4
    $region2: #{tpu_custom_call.1} parent=1 // loop_pre_header
      _
    $region3: #{tpu_custom_call.1} parent=1 // loop_header
      %s14 = sphi 0, %s18
      %p15 = scmp.ge.s32.totalorder %s14, 4
      %s24 = sphi 0, %s26
      %s27 = sphi 0, %s24
      %s28 = sphi 0, %s27
      %s44 = sphi 0, %s28
      %s48 = sphi 0, %s48
      %s50 = sphi 0, %s48
      %s51 = sphi 0, %s50
      %s65 = sphi 0, %s51
      %s69 = sphi 0, %s69
      %s71 = sphi 0, %s69
      %s72 = sphi 0, %s71
      %s86 = sphi 0, %s72
      %s90 = sphi 0, %s90
      %s92 = sphi 0, %s90
      %s93 = sphi 0, %s92
      %s107 = sphi 0, %s93
      %s111 = sphi 0, %s111
      %s113 = sphi 0, %s111
      %s114 = sphi 0, %s113
      %s128 = sphi 0, %s114
      %s134 = sphi 0, %s136
      %s137 = sphi 0, %s134
      %s138 = sphi 0, %s137
      %s154 = sphi 0, %s138
    $region4: #{tpu_custom_call.1} parent=1 // loop_header_branch
      %17 = sbr.rel (%p15) target = $region8
    $region5: #{tpu_custom_call.1} parent=1 // loop_body
      %s19 = ssub.s32 %s14, 1
      %s20 = ssub.s32 %s14, 2
      %s21 = sadd.s32 %s14, 1
      %s22 = ssub.s32 %s14, %s21
      %p23 = scmp.eq.s32.totalorder %s22, 0
      %s25 = sadd.s32 %s24, 1
      %s26 = scalar_select %p23, %s24, %s25
      %p29 = pneg %p23
      %p30 = scmp.eq.s32.totalorder %s14, 1
      %p31 = por %p29, %p30
      %p32 = scmp.ne.s32.totalorder %s24, %s27
      %p33 = scmp.eq.s32.totalorder %s14, 0
      %p34 = por %p32, %p33
      %p35 = scmp.ne.s32.totalorder %s24, %s27
      %p36 = scmp.eq.s32.totalorder %s19, 1
      %p37 = por %p35, %p36
      %p38 = scmp.ne.s32.totalorder %s27, %s28
      %p39 = scmp.eq.s32.totalorder %s19, 0
      %p40 = por %p38, %p39
      %p41 = scmp.ne.s32.totalorder %s27, %s28
      %p42 = scmp.eq.s32.totalorder %s20, 1
      %p43 = por %p41, %p42
      %p45 = scmp.ne.s32.totalorder %s28, %s44
      %p46 = scmp.eq.s32.totalorder %s20, 0
      %p47 = por %p45, %p46
      %s49 = sadd.s32 %s48, 1
      %p52 = scmp.eq.s32.totalorder %s14, 1
      %p53 = scmp.ne.s32.totalorder %s48, %s50
      %p54 = scmp.eq.s32.totalorder %s14, 0
      %p55 = por %p53, %p54
      %p56 = scmp.ne.s32.totalorder %s48, %s50
      %p57 = scmp.eq.s32.totalorder %s19, 1
      %p58 = por %p56, %p57
      %p59 = scmp.ne.s32.totalorder %s50, %s51
      %p60 = scmp.eq.s32.totalorder %s19, 0
      %p61 = por %p59, %p60
      %p62 = scmp.ne.s32.totalorder %s50, %s51
      %p63 = scmp.eq.s32.totalorder %s20, 1
      %p64 = por %p62, %p63
      %p66 = scmp.ne.s32.totalorder %s51, %s65
      %p67 = scmp.eq.s32.totalorder %s20, 0
      %p68 = por %p66, %p67
      %s70 = sadd.s32 %s69, 1
      %p73 = scmp.eq.s32.totalorder %s14, 1
      %p74 = scmp.ne.s32.totalorder %s69, %s71
      %p75 = scmp.eq.s32.totalorder %s14, 0
      %p76 = por %p74, %p75
      %p77 = scmp.ne.s32.totalorder %s69, %s71
      %p78 = scmp.eq.s32.totalorder %s19, 1
      %p79 = por %p77, %p78
      %p80 = scmp.ne.s32.totalorder %s71, %s72
      %p81 = scmp.eq.s32.totalorder %s19, 0
      %p82 = por %p80, %p81
      %p83 = scmp.ne.s32.totalorder %s71, %s72
      %p84 = scmp.eq.s32.totalorder %s20, 1
      %p85 = por %p83, %p84
      %p87 = scmp.ne.s32.totalorder %s72, %s86
      %p88 = scmp.eq.s32.totalorder %s20, 0
      %p89 = por %p87, %p88
      %s91 = sadd.s32 %s90, 1
      %p94 = scmp.eq.s32.totalorder %s14, 1
      %p95 = scmp.ne.s32.totalorder %s90, %s92
      %p96 = scmp.eq.s32.totalorder %s14, 0
      %p97 = por %p95, %p96
      %p98 = scmp.ne.s32.totalorder %s90, %s92
      %p99 = scmp.eq.s32.totalorder %s19, 1
      %p100 = por %p98, %p99
      %p101 = scmp.ne.s32.totalorder %s92, %s93
      %p102 = scmp.eq.s32.totalorder %s19, 0
      %p103 = por %p101, %p102
      %p104 = scmp.ne.s32.totalorder %s92, %s93
      %p105 = scmp.eq.s32.totalorder %s20, 1
      %p106 = por %p104, %p105
      %p108 = scmp.ne.s32.totalorder %s93, %s107
      %p109 = scmp.eq.s32.totalorder %s20, 0
      %p110 = por %p108, %p109
      %s112 = sadd.s32 %s111, 1
      %p115 = scmp.eq.s32.totalorder %s14, 1
      %p116 = scmp.ne.s32.totalorder %s111, %s113
      %p117 = scmp.eq.s32.totalorder %s14, 0
      %p118 = por %p116, %p117
      %p119 = scmp.ne.s32.totalorder %s111, %s113
      %p120 = scmp.eq.s32.totalorder %s19, 1
      %p121 = por %p119, %p120
      %p122 = scmp.ne.s32.totalorder %s113, %s114
      %p123 = scmp.eq.s32.totalorder %s19, 0
      %p124 = por %p122, %p123
      %p125 = scmp.ne.s32.totalorder %s113, %s114
      %p126 = scmp.eq.s32.totalorder %s20, 1
      %p127 = por %p125, %p126
      %p129 = scmp.ne.s32.totalorder %s114, %s128
      %p130 = scmp.eq.s32.totalorder %s20, 0
      %p131 = por %p129, %p130
      %s132 = ssub.s32 %s14, %s21
      %p133 = scmp.eq.s32.totalorder %s132, 0
      %s135 = sadd.s32 %s134, 1
      %s136 = scalar_select %p133, %s134, %s135
      %p139 = pneg %p133
      %p140 = scmp.eq.s32.totalorder %s14, 1
      %p141 = por %p139, %p140
      %p142 = scmp.ne.s32.totalorder %s134, %s137
      %p143 = scmp.eq.s32.totalorder %s14, 0
      %p144 = por %p142, %p143
      %p145 = scmp.ne.s32.totalorder %s134, %s137
      %p146 = scmp.eq.s32.totalorder %s19, 1
      %p147 = por %p145, %p146
      %p148 = scmp.ne.s32.totalorder %s137, %s138
      %p149 = scmp.eq.s32.totalorder %s19, 0
      %p150 = por %p148, %p149
      %p151 = scmp.ne.s32.totalorder %s137, %s138
      %p152 = scmp.eq.s32.totalorder %s20, 1
      %p153 = por %p151, %p152
      %p155 = scmp.ne.s32.totalorder %s138, %s154
      %p156 = scmp.eq.s32.totalorder %s20, 0
      %p157 = por %p155, %p156
      %p158 = scmp.le.s32.totalorder 1, %s14
      %p159 = scmp.lt.s32.totalorder %s14, 3
      %p160 = pnand %p158, %p159
      %p161 = pneg %p160
      // Predicated region
      $region9: #{tpu_custom_call.1} parent=5 // pred_check
        _
      $region10: #{tpu_custom_call.1} parent=5 // pred_check_branch
        %163 = sbr.rel (%p160) target = $region12
      $region11: #{tpu_custom_call.1} parent=5 // pred_region
        %s164 = ssub.s32 %s14, 1
        // Predicated region
        $region13: #{tpu_custom_call.1} parent=11 // pred_check
          %p165 = pneg %p61
        $region14: #{tpu_custom_call.1} parent=11 // pred_check_branch
          %167 = sbr.rel (%p165) target = $region16
        $region15: #{tpu_custom_call.1} parent=11 // pred_region
          _
        $region16: #{tpu_custom_call.1} parent=11 // pred_fallthru
          _
        // Predicated region
        $region17: #{tpu_custom_call.1} parent=11 // pred_check
          %p168 = pneg %p82
        $region18: #{tpu_custom_call.1} parent=11 // pred_check_branch
          %170 = sbr.rel (%p168) target = $region20
        $region19: #{tpu_custom_call.1} parent=11 // pred_region
          _
        $region20: #{tpu_custom_call.1} parent=11 // pred_fallthru
          _
        // Predicated region
        $region21: #{tpu_custom_call.1} parent=11 // pred_check
          %p171 = pneg %p103
        $region22: #{tpu_custom_call.1} parent=11 // pred_check_branch
          %173 = sbr.rel (%p171) target = $region24
        $region23: #{tpu_custom_call.1} parent=11 // pred_region
          _
        $region24: #{tpu_custom_call.1} parent=11 // pred_fallthru
          _
        // Predicated region
        $region25: #{tpu_custom_call.1} parent=11 // pred_check
          %p174 = pneg %p124
        $region26: #{tpu_custom_call.1} parent=11 // pred_check_branch
          %176 = sbr.rel (%p174) target = $region28
        $region27: #{tpu_custom_call.1} parent=11 // pred_region
          _
        $region28: #{tpu_custom_call.1} parent=11 // pred_fallthru
          _
      $region12: #{tpu_custom_call.1} parent=5 // pred_fallthru
        _
      %p177 = scmp.lt.s32.totalorder %s14, 2
      // Predicated region
      $region29: #{tpu_custom_call.1} parent=5 // pred_check
        %p178 = pneg %p177
      $region30: #{tpu_custom_call.1} parent=5 // pred_check_branch
        %180 = sbr.rel (%p178) target = $region32
      $region31: #{tpu_custom_call.1} parent=5 // pred_region
        // Predicated region
        $region33: #{tpu_custom_call.1} parent=31 // pred_check
          %p181 = pneg %p34
        $region34: #{tpu_custom_call.1} parent=31 // pred_check_branch
          %183 = sbr.rel (%p181) target = $region36
        $region35: #{tpu_custom_call.1} parent=31 // pred_region
          %s184 = smul.u32 16, %s14
          %p185 = scmp.lt.s32.totalorder %s184, 31
          %s186 = scalar_select %p185, %s184, 31
          %s187 = smul.addr %s186, 8
          %s188 = scalar_lea.vmem %s0, %s187
          %s189 = smul.u32 16, %s14
        $region36: #{tpu_custom_call.1} parent=31 // pred_fallthru
          _
      $region32: #{tpu_custom_call.1} parent=5 // pred_fallthru
        _
      %p190 = scmp.le.s32.totalorder 1, %s14
      %p191 = scmp.lt.s32.totalorder %s14, 3
      %p192 = pnand %p190, %p191
      %p193 = pneg %p192
      // Predicated region
      $region37: #{tpu_custom_call.1} parent=5 // pred_check
        _
      $region38: #{tpu_custom_call.1} parent=5 // pred_check_branch
        %195 = sbr.rel (%p192) target = $region40
      $region39: #{tpu_custom_call.1} parent=5 // pred_region
        %s196 = ssub.s32 %s14, 1
        %s197 = smul.u32 16, %s19
        %p198 = scmp.lt.s32.totalorder %s197, 31
        %s199 = scalar_select %p198, %s197, 31
        %s200 = smul.addr %s199, 8
        %s201 = scalar_lea.vmem %s0, %s200
        %p202 = pneg %p40
        %p203 = pneg %p37
        %p204 = pneg %p61
        %p205 = pneg %p58
        %p206 = pneg %p82
        %p207 = pneg %p79
        %p208 = pneg %p103
        %p209 = pneg %p100
        %p210 = pneg %p124
        %p211 = pneg %p121
        %p212 = pneg %p150
        %p213 = pneg %p147
        %s214 = sand.u32 %s137, 1
        %s215 = scalar_lea.sflag [#allocation3], %s214
        %s216 = sand.u32 %s137, 1
        %s217 = smul.addr %s216, 128
        %s218 = scalar_lea.vmem [#allocation2], %s217
        %s219 = smul.u32 16, %s19
        %p220 = scmp.lt.s32.totalorder %s219, 31
        %s221 = scalar_select %p220, %s219, 31
        %s222 = smul.addr %s221, 8
        %s223 = scalar_lea.vmem %s0, %s222
        %s224 = smul.u32 16, %s19
        %s225 = smul.u32 16, %s19
        %v227 = vld [vmem:[%s223] sm:$0xff]
        %v228 = vld [vmem:[%s223 + $0x8] sm:$0xff]
        %v229 = vld [vmem:[%s223 + $0x10] sm:$0xff]
        %v230 = vld [vmem:[%s223 + $0x18] sm:$0xff]
        %v231 = vld [vmem:[%s223 + $0x20] sm:$0xff]
        %v232 = vld [vmem:[%s223 + $0x28] sm:$0xff]
        %v233 = vld [vmem:[%s223 + $0x30] sm:$0xff]
        %v234 = vld [vmem:[%s223 + $0x38] sm:$0xff]
        %v235 = vld [vmem:[%s223 + $0x40] sm:$0xff]
        %v236 = vld [vmem:[%s223 + $0x48] sm:$0xff]
        %v237 = vld [vmem:[%s223 + $0x50] sm:$0xff]
        %v238 = vld [vmem:[%s223 + $0x58] sm:$0xff]
        %v239 = vld [vmem:[%s223 + $0x60] sm:$0xff]
        %v240 = vld [vmem:[%s223 + $0x68] sm:$0xff]
        %v241 = vld [vmem:[%s223 + $0x70] sm:$0xff]
        %v242 = vld [vmem:[%s223 + $0x78] sm:$0xff]
        %v243 = vpack.c.bf16 %v228, %v227
        %v244 = vpack.c.bf16 %v230, %v229
        %v245 = vpack.c.bf16 %v232, %v231
        %v246 = vpack.c.bf16 %v234, %v233
        %v247 = vpack.c.bf16 %v236, %v235
        %v248 = vpack.c.bf16 %v238, %v237
        %v249 = vpack.c.bf16 %v240, %v239
        %v250 = vpack.c.bf16 %v242, %v241
        %v251 = vld [vmem:[%s1] sm:$0xff]
        %v252 = vld [vmem:[%s1 + $0x8] sm:$0xff]
        %v253 = vld [vmem:[%s1 + $0x10] sm:$0xff]
        %v254 = vld [vmem:[%s1 + $0x18] sm:$0xff]
        %v255 = vld [vmem:[%s2] sm:$0x3]
        %v257 = vperm.slane %v255, 0
        %v258 = vperm.slane %v255, 1
        %v265 = vunpack.c.l.b16 %v251
        %v266 = vunpack.c.h.b16 %v251
        %v267 = vunpack.c.l.b16 %v252
        %v268 = vunpack.c.h.b16 %v252
        %v269 = vunpack.c.l.b16 %v253
        %v270 = vunpack.c.h.b16 %v253
        %v271 = vunpack.c.l.b16 %v254
        %v272 = vunpack.c.h.b16 %v254
        %v273 = vpack.c.b16 %v267, %v265
        %v274 = vpack.c.b16 %v268, %v266
        %v275 = vpack.c.b16 %v271, %v269
        %v276 = vpack.c.b16 %v272, %v270
        %vm281 = vcmask 261120
        %v283 = vsel %vm281, %v243, 0
        %v286 = vsel %vm281, %v244, 0
        %v289 = vsel %vm281, %v245, 0
        %v292 = vsel %vm281, %v246, 0
        %v295 = vsel %vm281, %v247, 0
        %v298 = vsel %vm281, %v248, 0
        %v301 = vsel %vm281, %v249, 0
        %v304 = vsel %vm281, %v250, 0
        %306 = vmatpush.bf16.msra.mxu0 0
        %307 = vmatpush.bf16.msra.mxu0 0
        %308 = vmatpush.bf16.msra.mxu0 0
        %309 = vmatpush.bf16.msra.mxu0 0
        %310 = vmatpush.bf16.msra.mxu0 0
        %311 = vmatpush.bf16.msra.mxu0 0
        %312 = vmatpush.bf16.msra.mxu0 %v275
        %313 = vmatpush.bf16.msra.mxu0 %v273
        %314 = vmatmul.bf16.gmra.mxu0 %v283
        %v315 = vpop.f32.mrf.mxu0
        %v316 = vadd.f32 %v257, %v315
        %v317 = vpop.f32.mrf.mxu0
        %v318 = vadd.f32 %v257, %v317
        %319 = vmatmul.bf16.gmra.mxu0 %v286
        %v320 = vpop.f32.mrf.mxu0
        %v321 = vadd.f32 %v257, %v320
        %v322 = vpop.f32.mrf.mxu0
        %v323 = vadd.f32 %v257, %v322
        %324 = vmatmul.bf16.gmra.mxu0 %v289
        %v325 = vpop.f32.mrf.mxu0
        %v326 = vadd.f32 %v257, %v325
        %v327 = vpop.f32.mrf.mxu0
        %v328 = vadd.f32 %v257, %v327
        %329 = vmatmul.bf16.gmra.mxu0 %v292
        %v330 = vpop.f32.mrf.mxu0
        %v331 = vadd.f32 %v257, %v330
        %v332 = vpop.f32.mrf.mxu0
        %v333 = vadd.f32 %v257, %v332
        %334 = vmatmul.bf16.gmra.mxu0 %v295
        %v335 = vpop.f32.mrf.mxu0
        %v336 = vadd.f32 %v257, %v335
        %v337 = vpop.f32.mrf.mxu0
        %v338 = vadd.f32 %v257, %v337
        %339 = vmatmul.bf16.gmra.mxu0 %v298
        %v340 = vpop.f32.mrf.mxu0
        %v341 = vadd.f32 %v257, %v340
        %v342 = vpop.f32.mrf.mxu0
        %v343 = vadd.f32 %v257, %v342
        %344 = vmatmul.bf16.gmra.mxu0 %v301
        %v345 = vpop.f32.mrf.mxu0
        %v346 = vadd.f32 %v257, %v345
        %v347 = vpop.f32.mrf.mxu0
        %v348 = vadd.f32 %v257, %v347
        %349 = vmatmul.bf16.gmra.mxu0 %v304
        %v350 = vpop.f32.mrf.mxu0
        %v351 = vadd.f32 %v257, %v350
        %v352 = vpop.f32.mrf.mxu0
        %v353 = vadd.f32 %v257, %v352
        %354 = vdwg.mxu0
        %355 = vmatpush.bf16.msra.mxu0 0
        %356 = vmatpush.bf16.msra.mxu0 0
        %357 = vmatpush.bf16.msra.mxu0 0
        %358 = vmatpush.bf16.msra.mxu0 0
        %359 = vmatpush.bf16.msra.mxu0 0
        %360 = vmatpush.bf16.msra.mxu0 0
        %361 = vmatpush.bf16.msra.mxu0 %v276
        %362 = vmatpush.bf16.msra.mxu0 %v274
        %363 = vmatmul.bf16.gmra.mxu0 %v283
        %v364 = vpop.f32.mrf.mxu0
        %v365 = vadd.f32 %v258, %v364
        %v366 = vpop.f32.mrf.mxu0
        %v367 = vadd.f32 %v258, %v366
        %368 = vmatmul.bf16.gmra.mxu0 %v286
        %v369 = vpop.f32.mrf.mxu0
        %v370 = vadd.f32 %v258, %v369
        %v371 = vpop.f32.mrf.mxu0
        %v372 = vadd.f32 %v258, %v371
        %373 = vmatmul.bf16.gmra.mxu0 %v289
        %v374 = vpop.f32.mrf.mxu0
        %v375 = vadd.f32 %v258, %v374
        %v376 = vpop.f32.mrf.mxu0
        %v377 = vadd.f32 %v258, %v376
        %378 = vmatmul.bf16.gmra.mxu0 %v292
        %v379 = vpop.f32.mrf.mxu0
        %v380 = vadd.f32 %v258, %v379
        %v381 = vpop.f32.mrf.mxu0
        %v382 = vadd.f32 %v258, %v381
        %383 = vmatmul.bf16.gmra.mxu0 %v295
        %v384 = vpop.f32.mrf.mxu0
        %v385 = vadd.f32 %v258, %v384
        %v386 = vpop.f32.mrf.mxu0
        %v387 = vadd.f32 %v258, %v386
        %388 = vmatmul.bf16.gmra.mxu0 %v298
        %v389 = vpop.f32.mrf.mxu0
        %v390 = vadd.f32 %v258, %v389
        %v391 = vpop.f32.mrf.mxu0
        %v392 = vadd.f32 %v258, %v391
        %393 = vmatmul.bf16.gmra.mxu0 %v301
        %v394 = vpop.f32.mrf.mxu0
        %v395 = vadd.f32 %v258, %v394
        %v396 = vpop.f32.mrf.mxu0
        %v397 = vadd.f32 %v258, %v396
        %398 = vmatmul.bf16.gmra.mxu0 %v304
        %v399 = vpop.f32.mrf.mxu0
        %v400 = vadd.f32 %v258, %v399
        %v401 = vpop.f32.mrf.mxu0
        %v402 = vadd.f32 %v258, %v401
        %403 = vdwg.mxu0
        %v404 = vmul.f32 %v365, %v365
        %v405 = vmul.f32 %v367, %v367
        %v406 = vmul.f32 %v370, %v370
        %v407 = vmul.f32 %v372, %v372
        %v408 = vmul.f32 %v375, %v375
        %v409 = vmul.f32 %v377, %v377
        %v410 = vmul.f32 %v380, %v380
        %v411 = vmul.f32 %v382, %v382
        %v412 = vmul.f32 %v385, %v385
        %v413 = vmul.f32 %v387, %v387
        %v414 = vmul.f32 %v390, %v390
        %v415 = vmul.f32 %v392, %v392
        %v416 = vmul.f32 %v395, %v395
        %v417 = vmul.f32 %v397, %v397
        %v418 = vmul.f32 %v400, %v400
        %v419 = vmul.f32 %v402, %v402
        %v420 = vadd.f32 %v316, %v404
        %v421 = vadd.f32 %v318, %v405
        %v422 = vadd.f32 %v321, %v406
        %v423 = vadd.f32 %v323, %v407
        %v424 = vadd.f32 %v326, %v408
        %v425 = vadd.f32 %v328, %v409
        %v426 = vadd.f32 %v331, %v410
        %v427 = vadd.f32 %v333, %v411
        %v428 = vadd.f32 %v336, %v412
        %v429 = vadd.f32 %v338, %v413
        %v430 = vadd.f32 %v341, %v414
        %v431 = vadd.f32 %v343, %v415
        %v432 = vadd.f32 %v346, %v416
        %v433 = vadd.f32 %v348, %v417
        %v434 = vadd.f32 %v351, %v418
        %v435 = vadd.f32 %v353, %v419
        %v436 = vmax.f32 %v420, 0.0
        %v437 = vmax.f32 %v421, 0.0
        %v438 = vmax.f32 %v422, 0.0
        %v439 = vmax.f32 %v423, 0.0
        %v440 = vmax.f32 %v424, 0.0
        %v441 = vmax.f32 %v425, 0.0
        %v442 = vmax.f32 %v426, 0.0
        %v443 = vmax.f32 %v427, 0.0
        %v444 = vmax.f32 %v428, 0.0
        %v445 = vmax.f32 %v429, 0.0
        %v446 = vmax.f32 %v430, 0.0
        %v447 = vmax.f32 %v431, 0.0
        %v448 = vmax.f32 %v432, 0.0
        %v449 = vmax.f32 %v433, 0.0
        %v450 = vmax.f32 %v434, 0.0
        %v451 = vmax.f32 %v435, 0.0
        %v452 = vpack.c.bf16 %v437, %v436
        %v453 = vpack.c.bf16 %v439, %v438
        %v454 = vpack.c.bf16 %v441, %v440
        %v455 = vpack.c.bf16 %v443, %v442
        %v456 = vpack.c.bf16 %v445, %v444
        %v457 = vpack.c.bf16 %v447, %v446
        %v458 = vpack.c.bf16 %v449, %v448
        %v459 = vpack.c.bf16 %v451, %v450
        %v460 = vld [vmem:[%s3] sm:$0xff]
        %v461 = vld [vmem:[%s3 + $0x8] sm:$0xff]
        %v462 = vld [vmem:[%s3 + $0x10] sm:$0xff]
        %v463 = vld [vmem:[%s3 + $0x18] sm:$0xff]
        %v464 = vld [vmem:[%s3 + $0x20] sm:$0xff]
        %v465 = vld [vmem:[%s3 + $0x28] sm:$0xff]
        %v466 = vld [vmem:[%s3 + $0x30] sm:$0xff]
        %v467 = vld [vmem:[%s3 + $0x38] sm:$0xff]
        %v468 = vld [vmem:[%s3 + $0x40] sm:$0xff]
        %v469 = vld [vmem:[%s3 + $0x48] sm:$0xff]
        %v470 = vld [vmem:[%s3 + $0x50] sm:$0xff]
        %v471 = vld [vmem:[%s3 + $0x58] sm:$0xff]
        %v472 = vld [vmem:[%s3 + $0x60] sm:$0xff]
        %v473 = vld [vmem:[%s3 + $0x68] sm:$0xff]
        %v474 = vld [vmem:[%s3 + $0x70] sm:$0xff]
        %v475 = vld [vmem:[%s3 + $0x78] sm:$0xff]
        %v476 = vld [vmem:[%s4] sm:$0x3]
        %v478 = vperm.slane %v476, 0
        %v479 = vperm.slane %v476, 1
        %v498 = vunpack.c.l.b16 %v460
        %v499 = vunpack.c.h.b16 %v460
        %v500 = vunpack.c.l.b16 %v461
        %v501 = vunpack.c.h.b16 %v461
        %v502 = vunpack.c.l.b16 %v462
        %v503 = vunpack.c.h.b16 %v462
        %v504 = vunpack.c.l.b16 %v463
        %v505 = vunpack.c.h.b16 %v463
        %v506 = vunpack.c.l.b16 %v464
        %v507 = vunpack.c.h.b16 %v464
        %v508 = vunpack.c.l.b16 %v465
        %v509 = vunpack.c.h.b16 %v465
        %v510 = vunpack.c.l.b16 %v466
        %v511 = vunpack.c.h.b16 %v466
        %v512 = vunpack.c.l.b16 %v467
        %v513 = vunpack.c.h.b16 %v467
        %v514 = vunpack.c.l.b16 %v468
        %v515 = vunpack.c.h.b16 %v468
        %v516 = vunpack.c.l.b16 %v469
        %v517 = vunpack.c.h.b16 %v469
        %v518 = vunpack.c.l.b16 %v470
        %v519 = vunpack.c.h.b16 %v470
        %v520 = vunpack.c.l.b16 %v471
        %v521 = vunpack.c.h.b16 %v471
        %v522 = vunpack.c.l.b16 %v472
        %v523 = vunpack.c.h.b16 %v472
        %v524 = vunpack.c.l.b16 %v473
        %v525 = vunpack.c.h.b16 %v473
        %v526 = vunpack.c.l.b16 %v474
        %v527 = vunpack.c.h.b16 %v474
        %v528 = vunpack.c.l.b16 %v475
        %v529 = vunpack.c.h.b16 %v475
        %v530 = vpack.c.b16 %v500, %v498
        %v531 = vpack.c.b16 %v501, %v499
        %v532 = vpack.c.b16 %v504, %v502
        %v533 = vpack.c.b16 %v505, %v503
        %v534 = vpack.c.b16 %v508, %v506
        %v535 = vpack.c.b16 %v509, %v507
        %v536 = vpack.c.b16 %v512, %v510
        %v537 = vpack.c.b16 %v513, %v511
        %v538 = vpack.c.b16 %v516, %v514
        %v539 = vpack.c.b16 %v517, %v515
        %v540 = vpack.c.b16 %v520, %v518
        %v541 = vpack.c.b16 %v521, %v519
        %v542 = vpack.c.b16 %v524, %v522
        %v543 = vpack.c.b16 %v525, %v523
        %v544 = vpack.c.b16 %v528, %v526
        %v545 = vpack.c.b16 %v529, %v527
        %562 = vmatpush.bf16.msra.mxu0 %v544
        %563 = vmatpush.bf16.msra.mxu0 %v542
        %564 = vmatpush.bf16.msra.mxu0 %v540
        %565 = vmatpush.bf16.msra.mxu0 %v538
        %566 = vmatpush.bf16.msra.mxu0 %v536
        %567 = vmatpush.bf16.msra.mxu0 %v534
        %568 = vmatpush.bf16.msra.mxu0 %v532
        %569 = vmatpush.bf16.msra.mxu0 %v530
        %570 = vmatmul.bf16.gmra.mxu0 %v452
        %v571 = vpop.f32.mrf.mxu0
        %v572 = vadd.f32 %v478, %v571
        %v573 = vpop.f32.mrf.mxu0
        %v574 = vadd.f32 %v478, %v573
        %575 = vmatmul.bf16.gmra.mxu0 %v453
        %v576 = vpop.f32.mrf.mxu0
        %v577 = vadd.f32 %v478, %v576
        %v578 = vpop.f32.mrf.mxu0
        %v579 = vadd.f32 %v478, %v578
        %580 = vmatmul.bf16.gmra.mxu0 %v454
        %v581 = vpop.f32.mrf.mxu0
        %v582 = vadd.f32 %v478, %v581
        %v583 = vpop.f32.mrf.mxu0
        %v584 = vadd.f32 %v478, %v583
        %585 = vmatmul.bf16.gmra.mxu0 %v455
        %v586 = vpop.f32.mrf.mxu0
        %v587 = vadd.f32 %v478, %v586
        %v588 = vpop.f32.mrf.mxu0
        %v589 = vadd.f32 %v478, %v588
        %590 = vmatmul.bf16.gmra.mxu0 %v456
        %v591 = vpop.f32.mrf.mxu0
        %v592 = vadd.f32 %v478, %v591
        %v593 = vpop.f32.mrf.mxu0
        %v594 = vadd.f32 %v478, %v593
        %595 = vmatmul.bf16.gmra.mxu0 %v457
        %v596 = vpop.f32.mrf.mxu0
        %v597 = vadd.f32 %v478, %v596
        %v598 = vpop.f32.mrf.mxu0
        %v599 = vadd.f32 %v478, %v598
        %600 = vmatmul.bf16.gmra.mxu0 %v458
        %v601 = vpop.f32.mrf.mxu0
        %v602 = vadd.f32 %v478, %v601
        %v603 = vpop.f32.mrf.mxu0
        %v604 = vadd.f32 %v478, %v603
        %605 = vmatmul.bf16.gmra.mxu0 %v459
        %v606 = vpop.f32.mrf.mxu0
        %v607 = vadd.f32 %v478, %v606
        %v608 = vpop.f32.mrf.mxu0
        %v609 = vadd.f32 %v478, %v608
        %610 = vdwg.mxu0
        %611 = vmatpush.bf16.msra.mxu0 %v545
        %612 = vmatpush.bf16.msra.mxu0 %v543
        %613 = vmatpush.bf16.msra.mxu0 %v541
        %614 = vmatpush.bf16.msra.mxu0 %v539
        %615 = vmatpush.bf16.msra.mxu0 %v537
        %616 = vmatpush.bf16.msra.mxu0 %v535
        %617 = vmatpush.bf16.msra.mxu0 %v533
        %618 = vmatpush.bf16.msra.mxu0 %v531
        %619 = vmatmul.bf16.gmra.mxu0 %v452
        %v620 = vpop.f32.mrf.mxu0
        %v621 = vadd.f32 %v479, %v620
        %v622 = vpop.f32.mrf.mxu0
        %v623 = vadd.f32 %v479, %v622
        %624 = vmatmul.bf16.gmra.mxu0 %v453
        %v625 = vpop.f32.mrf.mxu0
        %v626 = vadd.f32 %v479, %v625
        %v627 = vpop.f32.mrf.mxu0
        %v628 = vadd.f32 %v479, %v627
        %629 = vmatmul.bf16.gmra.mxu0 %v454
        %v630 = vpop.f32.mrf.mxu0
        %v631 = vadd.f32 %v479, %v630
        %v632 = vpop.f32.mrf.mxu0
        %v633 = vadd.f32 %v479, %v632
        %634 = vmatmul.bf16.gmra.mxu0 %v455
        %v635 = vpop.f32.mrf.mxu0
        %v636 = vadd.f32 %v479, %v635
        %v637 = vpop.f32.mrf.mxu0
        %v638 = vadd.f32 %v479, %v637
        %639 = vmatmul.bf16.gmra.mxu0 %v456
        %v640 = vpop.f32.mrf.mxu0
        %v641 = vadd.f32 %v479, %v640
        %v642 = vpop.f32.mrf.mxu0
        %v643 = vadd.f32 %v479, %v642
        %644 = vmatmul.bf16.gmra.mxu0 %v457
        %v645 = vpop.f32.mrf.mxu0
        %v646 = vadd.f32 %v479, %v645
        %v647 = vpop.f32.mrf.mxu0
        %v648 = vadd.f32 %v479, %v647
        %649 = vmatmul.bf16.gmra.mxu0 %v458
        %v650 = vpop.f32.mrf.mxu0
        %v651 = vadd.f32 %v479, %v650
        %v652 = vpop.f32.mrf.mxu0
        %v653 = vadd.f32 %v479, %v652
        %654 = vmatmul.bf16.gmra.mxu0 %v459
        %v655 = vpop.f32.mrf.mxu0
        %v656 = vadd.f32 %v479, %v655
        %v657 = vpop.f32.mrf.mxu0
        %v658 = vadd.f32 %v479, %v657
        %659 = vdwg.mxu0
        %v660 = vmul.f32 %v621, %v621
        %v661 = vmul.f32 %v623, %v623
        %v662 = vmul.f32 %v626, %v626
        %v663 = vmul.f32 %v628, %v628
        %v664 = vmul.f32 %v631, %v631
        %v665 = vmul.f32 %v633, %v633
        %v666 = vmul.f32 %v636, %v636
        %v667 = vmul.f32 %v638, %v638
        %v668 = vmul.f32 %v641, %v641
        %v669 = vmul.f32 %v643, %v643
        %v670 = vmul.f32 %v646, %v646
        %v671 = vmul.f32 %v648, %v648
        %v672 = vmul.f32 %v651, %v651
        %v673 = vmul.f32 %v653, %v653
        %v674 = vmul.f32 %v656, %v656
        %v675 = vmul.f32 %v658, %v658
        %v676 = vadd.f32 %v572, %v660
        %v677 = vadd.f32 %v574, %v661
        %v678 = vadd.f32 %v577, %v662
        %v679 = vadd.f32 %v579, %v663
        %v680 = vadd.f32 %v582, %v664
        %v681 = vadd.f32 %v584, %v665
        %v682 = vadd.f32 %v587, %v666
        %v683 = vadd.f32 %v589, %v667
        %v684 = vadd.f32 %v592, %v668
        %v685 = vadd.f32 %v594, %v669
        %v686 = vadd.f32 %v597, %v670
        %v687 = vadd.f32 %v599, %v671
        %v688 = vadd.f32 %v602, %v672
        %v689 = vadd.f32 %v604, %v673
        %v690 = vadd.f32 %v607, %v674
        %v691 = vadd.f32 %v609, %v675
        %692 = vst [vmem:[%s218] sm:$0xff] %v676
        %693 = vst [vmem:[%s218 + $0x8] sm:$0xff] %v677
        %694 = vst [vmem:[%s218 + $0x10] sm:$0xff] %v678
        %695 = vst [vmem:[%s218 + $0x18] sm:$0xff] %v679
        %696 = vst [vmem:[%s218 + $0x20] sm:$0xff] %v680
        %697 = vst [vmem:[%s218 + $0x28] sm:$0xff] %v681
        %698 = vst [vmem:[%s218 + $0x30] sm:$0xff] %v682
        %699 = vst [vmem:[%s218 + $0x38] sm:$0xff] %v683
        %700 = vst [vmem:[%s218 + $0x40] sm:$0xff] %v684
        %701 = vst [vmem:[%s218 + $0x48] sm:$0xff] %v685
        %702 = vst [vmem:[%s218 + $0x50] sm:$0xff] %v686
        %703 = vst [vmem:[%s218 + $0x58] sm:$0xff] %v687
        %704 = vst [vmem:[%s218 + $0x60] sm:$0xff] %v688
        %705 = vst [vmem:[%s218 + $0x68] sm:$0xff] %v689
        %706 = vst [vmem:[%s218 + $0x70] sm:$0xff] %v690
        %707 = vst [vmem:[%s218 + $0x78] sm:$0xff] %v691
        %s708 = sand.u32 %s137, 1
        %s709 = scalar_lea.sflag [#allocation3], %s708
        %s710 = sand.u32 %s137, 1
        %s711 = smul.addr %s710, 128
        %s712 = scalar_lea.vmem [#allocation2], %s711
        // Predicated region
        $region41: #{tpu_custom_call.1} parent=39 // pred_check
          %p713 = pneg %p147
        $region42: #{tpu_custom_call.1} parent=39 // pred_check_branch
          %715 = sbr.rel (%p713) target = $region44
        $region43: #{tpu_custom_call.1} parent=39 // pred_region
          %s716 = smul.u32 16, %s19
          %718 = vsyncadd %s709, 0
          %s719 = smul.addr %s716, 8
          %s720 = scalar_lea.hbm %s5, %s719
          %s721 = sshll.u32 %s712, 4
          %s722 = int_to_ptr.vmem [resolvable:$true] %s721
          %s723 = sshll.u32 %s720, 4
          %s724 = int_to_ptr.hbm [resolvable:$true] %s723
          %729 = dma.vmem_to_hbm [thread:$0]  %s722, 2048, %s724, %s709, 128, 128, 8
        $region44: #{tpu_custom_call.1} parent=39 // pred_fallthru
          _
      $region40: #{tpu_custom_call.1} parent=5 // pred_fallthru
        _
      %p730 = scmp.le.s32.totalorder 2, %s14
      // Predicated region
      $region45: #{tpu_custom_call.1} parent=5 // pred_check
        %p731 = pneg %p730
      $region46: #{tpu_custom_call.1} parent=5 // pred_check_branch
        %733 = sbr.rel (%p731) target = $region48
      $region47: #{tpu_custom_call.1} parent=5 // pred_region
        %s734 = ssub.s32 %s14, 2
        // Predicated region
        $region49: #{tpu_custom_call.1} parent=47 // pred_check
          %p735 = pneg %p153
        $region50: #{tpu_custom_call.1} parent=47 // pred_check_branch
          %737 = sbr.rel (%p735) target = $region52
        $region51: #{tpu_custom_call.1} parent=47 // pred_region
          %s738 = sand.u32 %s138, 1
          %s739 = scalar_lea.sflag [#allocation3], %s738
          %s740 = sand.u32 %s138, 1
          %s741 = smul.addr %s740, 128
          %s742 = scalar_lea.vmem [#allocation2], %s741
          %744 = dma.done %s739, 2048
        $region52: #{tpu_custom_call.1} parent=47 // pred_fallthru
          _
      $region48: #{tpu_custom_call.1} parent=5 // pred_fallthru
        _
    $region6: #{tpu_custom_call.1} parent=1 // loop_footer
      %s18 = sadd.s32 1, %s14
    $region7: #{tpu_custom_call.1} parent=1 // loop_footer_branch
      %13 = sbr.rel target = $region3
    $region8: #{tpu_custom_call.1} parent=1 // loop_exit
      _
    %745 = vsyncpa [#allocation3], 1
    %s746 = scalar_lea.sflag [#allocation3], 1
    %747 = vsyncpa %s746, 1

</llo_original>
